<compile_context>
chip_gen: v7x
topology: tpu7x:2x2x1
jax: 0.10.0
libtpu: 0.0.40
codegen_flags: <defaults>
</compile_context>

<pallas_src>
import numpy as np
import jax
import jax.numpy as jnp
from jax import lax
from jax.experimental import pallas as pl
from jax.experimental.pallas import tpu as pltpu  # noqa: F401  (kept for TPU-specific tuning hooks)


def adaptive_attention_kernel(x_ref, w_ref, b_ref, band_ref, o_ref):
    # x_ref    : (B*T, D)      bf16   batch folded into rows
    # w_ref    : (D, 3*128)    bf16   fused, pre-transposed, lane-padded QKV
    #                                 weight; 1/sqrt(D) folded into Wq cols
    # b_ref    : (1, 3*128)    f32    fused, lane-padded QKV bias
    # band_ref : (B*T, B*T)    f32    block-diagonal banded mask {0, -1e30}
    # o_ref    : (B*T, 128)    f32    lane-dense output (cols D..127 are zero)
    dp = o_ref.shape[-1]                                   # 128 (lane-padded D)
    x = x_ref[...]                                         # (BT, D) bf16

    # Single fused QKV projection on the MXU, f32 accumulation.
    qkv = jnp.dot(x, w_ref[...],
                  preferred_element_type=jnp.float32) + b_ref[...]   # (BT, 384)

    # Lane-aligned slices (columns 0 / 128 / 256).
    q = qkv[:, :dp].astype(jnp.bfloat16)                   # scale already folded in
    k = qkv[:, dp:2 * dp].astype(jnp.bfloat16)
    v = qkv[:, 2 * dp:].astype(jnp.bfloat16)

    # scores[i, j] = <q_i, k_j>  (padded lanes are zero, so they don't
    # contribute), plus the block-diagonal banded additive mask.
    scores = lax.dot_general(q, k, (((1,), (1,)), ((), ())),
                             preferred_element_type=jnp.float32)      # (BT, BT)
    scores = scores + band_ref[...]

    # Masked softmax over the key axis (f32); reciprocal goes to the EUP slot.
    m = jnp.max(scores, axis=-1, keepdims=True)
    e = jnp.exp(scores - m)
    inv = pl.reciprocal(jnp.sum(e, axis=-1, keepdims=True), approx=True)
    weights = (e * inv).astype(jnp.bfloat16)

    # Padded V columns are zero, so output cols D..127 come out zero.
    o_ref[...] = jnp.dot(weights, v, preferred_element_type=jnp.float32)


def adaptive_attention(x, wq, bq, wk, bk, wv, bv, span):
    B, T, D = x.shape
    BT = B * T
    scale = 1.0 / float(D) ** 0.5
    DP = max(128, ((D + 127) // 128) * 128)                # lane-padded width

    # Fuse + pre-transpose nn.Linear weights: (out, in) -> (in, out), pad each
    # projection to DP output columns, concat -> (D, 3*DP). Fold the 1/sqrt(D)
    # scale into the Wq columns (and bq). Matmul operands in bf16.
    wpad = jnp.zeros((D, DP - D), dtype=jnp.float32)
    w_fused = jnp.concatenate(
        [wq.T * scale, wpad, wk.T, wpad, wv.T, wpad], axis=1
    ).astype(jnp.bfloat16)                                 # (D, 3*DP)

    bpad = jnp.zeros((1, DP - D), dtype=jnp.float32)
    b_fused = jnp.concatenate(
        [bq.reshape(1, D) * scale, bpad,
         bk.reshape(1, D), bpad,
         bv.reshape(1, D), bpad], axis=1
    ).astype(jnp.float32)                                  # (1, 3*DP)

    x2d = x.reshape(BT, D).astype(jnp.bfloat16)

    # Static block-diagonal banded additive bias, built once at trace time.
    # Block-diagonal structure prevents cross-batch attention after the
    # batch dimension is folded into the row dimension.
    t_idx = np.arange(T)
    diff = t_idx[:, None] - t_idx[None, :]
    band_tt = np.where((diff >= 0) & (diff < int(span)), 0.0, -1e30).astype(np.float32)
    band = np.full((BT, BT), -1e30, dtype=np.float32)
    for b in range(B):
        band[b * T:(b + 1) * T, b * T:(b + 1) * T] = band_tt
    band = jnp.asarray(band)                               # (BT, BT)

    out_padded = pl.pallas_call(
        adaptive_attention_kernel,
        out_shape=jax.ShapeDtypeStruct((BT, DP), jnp.float32),
        grid=(1,),
        in_specs=[
            pl.BlockSpec((BT, D), lambda i: (0, 0)),       # x (batch folded)
            pl.BlockSpec((D, 3 * DP), lambda i: (0, 0)),   # fused weight
            pl.BlockSpec((1, 3 * DP), lambda i: (0, 0)),   # fused bias
            pl.BlockSpec((BT, BT), lambda i: (0, 0)),      # block-diag band
        ],
        out_specs=pl.BlockSpec((BT, DP), lambda i: (0, 0)),
    )(x2d, w_fused, b_fused, band)

    return out_padded[:, :D].reshape(B, T, D).astype(x.dtype)


def reference_forward(x, wq, bq, wk, bk, wv, bv, span):
    """Pure-numpy re-implementation of the PyTorch forward loop (f32)."""
    x = np.asarray(x, np.float32)
    B, T, D = x.shape
    q = x @ np.asarray(wq).T + np.asarray(bq).reshape(-1)
    k = x @ np.asarray(wk).T + np.asarray(bk).reshape(-1)
    v = x @ np.asarray(wv).T + np.asarray(bv).reshape(-1)
    out = np.zeros_like(x)
    for t in range(T):
        s = min(span, t + 1)
        start = t - s + 1
        q_t = q[:, t:t + 1, :]
        k_w = k[:, start:t + 1, :]
        v_w = v[:, start:t + 1, :]
        sc = q_t @ np.transpose(k_w, (0, 2, 1)) / D ** 0.5
        sc = sc - sc.max(axis=-1, keepdims=True)
        w = np.exp(sc)
        w = w / w.sum(axis=-1, keepdims=True)
        out[:, t:t + 1, :] = w @ v_w
    return out


if __name__ == "__main__":
    B, T, D = 2, 10, 64
    window_size = 5
    # Deterministic stand-in for torch.randint(1, window_size + 1, (1,)).
    span = 3

    key = jax.random.PRNGKey(0)
    kx, kq, kbq, kk, kbk, kv, kbv = jax.random.split(key, 7)

    x = jax.random.normal(kx, (B, T, D), dtype=jnp.float32)
    wq = jax.random.normal(kq, (D, D), dtype=jnp.float32) * 0.05
    bq = jax.random.normal(kbq, (1, D), dtype=jnp.float32) * 0.05
    wk = jax.random.normal(kk, (D, D), dtype=jnp.float32) * 0.05
    bk = jax.random.normal(kbk, (1, D), dtype=jnp.float32) * 0.05
    wv = jax.random.normal(kv, (D, D), dtype=jnp.float32) * 0.05
    bv = jax.random.normal(kbv, (1, D), dtype=jnp.float32) * 0.05

    out = adaptive_attention(x, wq, bq, wk, bk, wv, bv, span)
    out = jax.block_until_ready(out)

    ref = reference_forward(np.asarray(x), wq, bq, wk, bk, wv, bv, span)
    # Tolerance accounts for bf16 matmul operands (f32 accumulation) and the
    # approximate EUP reciprocal in the softmax.
    np.testing.assert_allclose(np.asarray(out), ref, atol=2e-2, rtol=2e-2)

    print("KERNEL_OK")
</pallas_src>

<mosaic_0001>
module attributes {stable_mosaic.version = 11 : i64} {
  func.func @adaptive_attention_kernel(%arg0: i32, %arg1: memref<20x64xbf16, #tpu.memory_space<vmem>>, %arg2: memref<64x384xbf16, #tpu.memory_space<vmem>>, %arg3: memref<1x384xf32, #tpu.memory_space<vmem>>, %arg4: memref<20x20xf32, #tpu.memory_space<vmem>>, %arg5: memref<20x128xf32, #tpu.memory_space<vmem>>) attributes {dimension_semantics = [#tpu.dimension_semantics<arbitrary>], iteration_bounds = array<i64: 1>, scalar_prefetch = 0 : i64, scratch_operands = 0 : i64, tpu.core_type = #tpu.core_type<tc>, window_params = [{pipeline_mode = #tpu.pipeline_mode<synchronous>, transform_indices = @transform_0, window_bounds = array<i64: 20, 64>}, {pipeline_mode = #tpu.pipeline_mode<synchronous>, transform_indices = @transform_1, window_bounds = array<i64: 64, 384>}, {pipeline_mode = #tpu.pipeline_mode<synchronous>, transform_indices = @transform_2, window_bounds = array<i64: 1, 384>}, {pipeline_mode = #tpu.pipeline_mode<synchronous>, transform_indices = @transform_3, window_bounds = array<i64: 20, 20>}, {pipeline_mode = #tpu.pipeline_mode<synchronous>, transform_indices = @transform_4, window_bounds = array<i64: 20, 128>}]} {
    %c0 = arith.constant 0 : index
    %c0_0 = arith.constant 0 : index
    %0 = vector.load %arg1[%c0, %c0_0] : memref<20x64xbf16, #tpu.memory_space<vmem>>, vector<20x64xbf16>
    %c0_1 = arith.constant 0 : index
    %c0_2 = arith.constant 0 : index
    %1 = vector.load %arg2[%c0_1, %c0_2] : memref<64x384xbf16, #tpu.memory_space<vmem>>, vector<64x384xbf16>
    %cst = arith.constant dense<0.000000e+00> : vector<20x384xf32>
    %2 = tpu.matmul %0, %1, %cst {dimension_numbers = #tpu.dot_dimension_numbers<[1], [0], [0], [1], [0, 0, 1, 1], [], []>} : vector<20x64xbf16>, vector<64x384xbf16>, vector<20x384xf32> -> vector<20x384xf32>
    %c0_3 = arith.constant 0 : index
    %c0_4 = arith.constant 0 : index
    %3 = vector.load %arg3[%c0_3, %c0_4] : memref<1x384xf32, #tpu.memory_space<vmem>>, vector<1x384xf32>
    %4 = vector.broadcast %3 : vector<1x384xf32> to vector<20x384xf32>
    %5 = arith.addf %2, %4 : vector<20x384xf32>
    %6 = vector.extract_strided_slice %5 {offsets = [0, 0], sizes = [20, 128], strides = [1, 1]} : vector<20x384xf32> to vector<20x128xf32>
    %7 = arith.truncf %6 : vector<20x128xf32> to vector<20x128xbf16>
    %8 = vector.extract_strided_slice %5 {offsets = [0, 128], sizes = [20, 128], strides = [1, 1]} : vector<20x384xf32> to vector<20x128xf32>
    %9 = arith.truncf %8 : vector<20x128xf32> to vector<20x128xbf16>
    %10 = vector.extract_strided_slice %5 {offsets = [0, 256], sizes = [20, 128], strides = [1, 1]} : vector<20x384xf32> to vector<20x128xf32>
    %11 = arith.truncf %10 : vector<20x128xf32> to vector<20x128xbf16>
    %cst_5 = arith.constant dense<0.000000e+00> : vector<20x20xf32>
    %12 = tpu.matmul %7, %9, %cst_5 {dimension_numbers = #tpu.dot_dimension_numbers<[1], [1], [0], [0], [0, 0, 1, 0], [], []>} : vector<20x128xbf16>, vector<20x128xbf16>, vector<20x20xf32> -> vector<20x20xf32>
    %c0_6 = arith.constant 0 : index
    %c0_7 = arith.constant 0 : index
    %13 = vector.load %arg4[%c0_6, %c0_7] : memref<20x20xf32, #tpu.memory_space<vmem>>, vector<20x20xf32>
    %14 = arith.addf %12, %13 : vector<20x20xf32>
    %cst_8 = arith.constant dense<0xFF800000> : vector<20xf32>
    %15 = vector.multi_reduction <maximumf>, %14, %cst_8 [1] : vector<20x20xf32> to vector<20xf32>
    %16 = vector.shape_cast %15 : vector<20xf32> to vector<20x1xf32>
    %17 = vector.broadcast %16 : vector<20x1xf32> to vector<20x20xf32>
    %18 = arith.subf %14, %17 : vector<20x20xf32>
    %19 = math.exp %18 : vector<20x20xf32>
    %cst_9 = arith.constant dense<0.000000e+00> : vector<20xf32>
    %20 = vector.multi_reduction <add>, %19, %cst_9 [1] : vector<20x20xf32> to vector<20xf32>
    %21 = vector.shape_cast %20 : vector<20xf32> to vector<20x1xf32>
    %22 = tpu.reciprocal %21 {approx = true} : vector<20x1xf32> -> vector<20x1xf32>
    %23 = vector.broadcast %22 : vector<20x1xf32> to vector<20x20xf32>
    %24 = arith.mulf %19, %23 : vector<20x20xf32>
    %25 = arith.truncf %24 : vector<20x20xf32> to vector<20x20xbf16>
    %cst_10 = arith.constant dense<0.000000e+00> : vector<20x128xf32>
    %26 = tpu.matmul %25, %11, %cst_10 {dimension_numbers = #tpu.dot_dimension_numbers<[1], [0], [0], [1], [0, 0, 1, 1], [], []>} : vector<20x20xbf16>, vector<20x128xbf16>, vector<20x128xf32> -> vector<20x128xf32>
    %c0_11 = arith.constant 0 : index
    %c0_12 = arith.constant 0 : index
    %27 = vector.load %arg5[%c0_11, %c0_12] : memref<20x128xf32, #tpu.memory_space<vmem>>, vector<20x128xf32>
    tpu.vector_store %arg5[%c0_11, %c0_12], %26 {strides = array<i32>} : memref<20x128xf32, #tpu.memory_space<vmem>>, vector<20x128xf32>,
    return
  }
  func.func @transform_0(%arg0: i32) -> (i32, i32) {
    %c0_i32 = arith.constant 0 : i32
    %c0_i32_0 = arith.constant 0 : i32
    %c0_i32_1 = arith.constant 0 : i32
    return %c0_i32, %c0_i32_0 : i32, i32
  }
  func.func @transform_1(%arg0: i32) -> (i32, i32) {
    %c0_i32 = arith.constant 0 : i32
    %c0_i32_0 = arith.constant 0 : i32
    %c0_i32_1 = arith.constant 0 : i32
    return %c0_i32, %c0_i32_0 : i32, i32
  }
  func.func @transform_2(%arg0: i32) -> (i32, i32) {
    %c0_i32 = arith.constant 0 : i32
    %c0_i32_0 = arith.constant 0 : i32
    %c0_i32_1 = arith.constant 0 : i32
    return %c0_i32, %c0_i32_0 : i32, i32
  }
  func.func @transform_3(%arg0: i32) -> (i32, i32) {
    %c0_i32 = arith.constant 0 : i32
    %c0_i32_0 = arith.constant 0 : i32
    %c0_i32_1 = arith.constant 0 : i32
    return %c0_i32, %c0_i32_0 : i32, i32
  }
  func.func @transform_4(%arg0: i32) -> (i32, i32) {
    %c0_i32 = arith.constant 0 : i32
    %c0_i32_0 = arith.constant 0 : i32
    %c0_i32_1 = arith.constant 0 : i32
    return %c0_i32, %c0_i32_0 : i32, i32
  }
}

</mosaic_0001>

<llo_original>
// kernel: tpu_custom_call.1
$region0: #{tpu_custom_call.1}
  #allocation0 [shape = 'u32[]', space=smem, size = 0x4, offset = 0x4, fixed_abs, tag = 'smem constant byte address 0x4 - core index']
  #allocation1 [shape = 'u32[144,128]{1,0:T(1,128)}', space=vmem, size = 0x12000, scoped, tag = 'internal scratch']
  %s0 = inlined_call_operand.hbm [shape: bf16[20,64], index: 0, kind: input, shape index: {}]
  %s1 = inlined_call_operand.hbm [shape: bf16[64,384], index: 1, kind: input, shape index: {}]
  %s2 = inlined_call_operand.vmem [shape: f32[1,384], index: 2, kind: input, shape index: {}]
  %s3 = inlined_call_operand.hbm [shape: f32[20,20], index: 3, kind: input, shape index: {}]
  %s4 = inlined_call_operand.hbm [shape: f32[20,128], index: 4, kind: output, shape index: {}]
  %s5 = sld [smem:[#allocation0]]
  $region38: #{tpu_custom_call.1} parent=0
    _
  %s7 = ssub.s32 1, %s5
  %s8 = scalar_select 0, %s7, %s5
  $region1: #{tpu_custom_call.1} parent=0
    #allocation2 [shape = 'u8[6144]{0}', space=vmem, size = 0x1800, scoped, tag = 'input window, operand 0, single buffered']
    #allocation3 [shape = 's32[1]{0}', space=sflag, size = 0x4, scoped, tag = 'scoped memory for tpu_custom_call.1']
    #allocation4 [shape = 's32[1]{0}', space=sflag, size = 0x4, scoped, tag = 'scoped memory for tpu_custom_call.1']
    #allocation5 [shape = 'u8[49152]{0}', space=vmem, size = 0xc000, scoped, tag = 'input window, operand 1, single buffered']
    #allocation6 [shape = 's32[1]{0}', space=sflag, size = 0x4, scoped, tag = 'scoped memory for tpu_custom_call.1']
    #allocation7 [shape = 'u8[12288]{0}', space=vmem, size = 0x3000, scoped, tag = 'input window, operand 3, single buffered']
    #allocation8 [shape = 'u8[12288]{0}', space=vmem, size = 0x3000, scoped, tag = 'output window, operand 0, single buffered']
    %9 = vsyncpa [#allocation3], 0
    %10 = vsyncpa [#allocation6], 0
    %11 = vsyncpa [#allocation4], 0
    // Predicated region
    $region2: #{tpu_custom_call.1} parent=1 // pred_check
      _
    $region3: #{tpu_custom_call.1} parent=1 // pred_check_branch
      %13 = sbr.rel (0) target = $region5
    $region4: #{tpu_custom_call.1} parent=1 // pred_region
      %s15 = ssub.s32 192, 192
      %16 = vsyncadd [#allocation3], %s15
      %s17 = sshll.u32 [#allocation2], 4
      %s18 = int_to_ptr.vmem [resolvable:$true] %s17
      %23 = dma.hbm_to_vmem [thread:$0]  %s0, 192, %s18, [#allocation3], 64, 64, 4
    $region5: #{tpu_custom_call.1} parent=1 // pred_fallthru
      _
    // Predicated region
    $region6: #{tpu_custom_call.1} parent=1 // pred_check
      _
    $region7: #{tpu_custom_call.1} parent=1 // pred_check_branch
      %25 = sbr.rel (0) target = $region9
    $region8: #{tpu_custom_call.1} parent=1 // pred_region
      %s27 = ssub.s32 1536, 1536
      %28 = vsyncadd [#allocation6], %s27
      %s29 = sshll.u32 [#allocation5], 4
      %s30 = int_to_ptr.vmem [resolvable:$true] %s29
      %35 = dma.hbm_to_vmem [thread:$0]  %s1, 1536, %s30, [#allocation6], 192, 192, 12
    $region9: #{tpu_custom_call.1} parent=1 // pred_fallthru
      _
    // Predicated region
    $region10: #{tpu_custom_call.1} parent=1 // pred_check
      _
    $region11: #{tpu_custom_call.1} parent=1 // pred_check_branch
      %37 = sbr.rel (0) target = $region13
    $region12: #{tpu_custom_call.1} parent=1 // pred_region
      _
    $region13: #{tpu_custom_call.1} parent=1 // pred_fallthru
      _
    // Predicated region
    $region14: #{tpu_custom_call.1} parent=1 // pred_check
      _
    $region15: #{tpu_custom_call.1} parent=1 // pred_check_branch
      %39 = sbr.rel (0) target = $region17
    $region16: #{tpu_custom_call.1} parent=1 // pred_region
      %s41 = ssub.s32 384, 384
      %42 = vsyncadd [#allocation6], %s41
      %s43 = sshll.u32 [#allocation7], 4
      %s44 = int_to_ptr.vmem [resolvable:$true] %s43
      %49 = dma.hbm_to_vmem [thread:$0]  %s3, 384, %s44, [#allocation6], 128, 128, 8
    $region17: #{tpu_custom_call.1} parent=1 // pred_fallthru
      _
    // Predicated region
    $region18: #{tpu_custom_call.1} parent=1 // pred_check
      _
    $region19: #{tpu_custom_call.1} parent=1 // pred_check_branch
      %51 = sbr.rel (0) target = $region21
    $region20: #{tpu_custom_call.1} parent=1 // pred_region
      %52 = dma.done [#allocation3], 192
    $region21: #{tpu_custom_call.1} parent=1 // pred_fallthru
      _
    // Predicated region
    $region22: #{tpu_custom_call.1} parent=1 // pred_check
      _
    $region23: #{tpu_custom_call.1} parent=1 // pred_check_branch
      %54 = sbr.rel (0) target = $region25
    $region24: #{tpu_custom_call.1} parent=1 // pred_region
      %55 = dma.done [#allocation6], 1536
    $region25: #{tpu_custom_call.1} parent=1 // pred_fallthru
      _
    // Predicated region
    $region26: #{tpu_custom_call.1} parent=1 // pred_check
      _
    $region27: #{tpu_custom_call.1} parent=1 // pred_check_branch
      %57 = sbr.rel (0) target = $region29
    $region28: #{tpu_custom_call.1} parent=1 // pred_region
      %58 = dma.done [#allocation6], 384
    $region29: #{tpu_custom_call.1} parent=1 // pred_fallthru
      _
    %v60 = vld [vmem:[#allocation2] sm:$0xf]
    %v61 = vld [vmem:[#allocation2 + $0x4] sm:$0xf]
    %v62 = vld [vmem:[#allocation2 + $0x8] sm:$0x3]
    %v63 = vld [vmem:[#allocation5] sm:$0xff]
    %v64 = vld [vmem:[#allocation5 + $0x8] sm:$0xf]
    %v65 = vld [vmem:[#allocation5 + $0xc] sm:$0xff]
    %v66 = vld [vmem:[#allocation5 + $0x14] sm:$0xf]
    %v67 = vld [vmem:[#allocation5 + $0x18] sm:$0xff]
    %v68 = vld [vmem:[#allocation5 + $0x20] sm:$0xf]
    %v69 = vld [vmem:[#allocation5 + $0x24] sm:$0xff]
    %v70 = vld [vmem:[#allocation5 + $0x2c] sm:$0xf]
    %v71 = vld [vmem:[#allocation5 + $0x30] sm:$0xff]
    %v72 = vld [vmem:[#allocation5 + $0x38] sm:$0xf]
    %v73 = vld [vmem:[#allocation5 + $0x3c] sm:$0xff]
    %v74 = vld [vmem:[#allocation5 + $0x44] sm:$0xf]
    %v75 = vld [vmem:[#allocation5 + $0x48] sm:$0xff]
    %v76 = vld [vmem:[#allocation5 + $0x50] sm:$0xf]
    %v77 = vld [vmem:[#allocation5 + $0x54] sm:$0xff]
    %v78 = vld [vmem:[#allocation5 + $0x5c] sm:$0xf]
    %v79 = vld [vmem:[%s2] sm:$0x7]
    %v81 = vlaneseq
    %v82 = vshrl.u32 %v81, 7
    %v83 = vsub.s32 0, %v82
    %v84 = vrot.slane %v79, %v83
    %v85 = vlaneseq
    %v86 = vshrl.u32 %v85, 7
    %v87 = vsub.s32 1, %v86
    %v88 = vrot.slane %v79, %v87
    %v89 = vlaneseq
    %v90 = vshrl.u32 %v89, 7
    %v91 = vsub.s32 2, %v90
    %v92 = vrot.slane %v79, %v91
    %v99 = vunpack.c.l.b16 %v60
    %v100 = vunpack.c.l.b16 %v61
    %v101 = vunpack.c.l.b16 %v62
    %v102 = vpack.c.b16 %v100, %v99
    %v103 = vpack.c.b16 %v101, %v101
    %v120 = vunpack.c.l.b16 %v63
    %v121 = vunpack.c.h.b16 %v63
    %v122 = vunpack.c.l.b16 %v64
    %v123 = vunpack.c.l.b16 %v65
    %v124 = vunpack.c.h.b16 %v65
    %v125 = vunpack.c.l.b16 %v66
    %v126 = vunpack.c.l.b16 %v67
    %v127 = vunpack.c.h.b16 %v67
    %v128 = vunpack.c.l.b16 %v68
    %v129 = vunpack.c.l.b16 %v69
    %v130 = vunpack.c.h.b16 %v69
    %v131 = vunpack.c.l.b16 %v70
    %v132 = vunpack.c.l.b16 %v71
    %v133 = vunpack.c.h.b16 %v71
    %v134 = vunpack.c.l.b16 %v72
    %v135 = vunpack.c.l.b16 %v73
    %v136 = vunpack.c.h.b16 %v73
    %v137 = vunpack.c.l.b16 %v74
    %v138 = vunpack.c.l.b16 %v75
    %v139 = vunpack.c.h.b16 %v75
    %v140 = vunpack.c.l.b16 %v76
    %v141 = vunpack.c.l.b16 %v77
    %v142 = vunpack.c.h.b16 %v77
    %v143 = vunpack.c.l.b16 %v78
    %v144 = vpack.c.b16 %v123, %v120
    %v145 = vpack.c.b16 %v124, %v121
    %v146 = vpack.c.b16 %v125, %v122
    %v147 = vpack.c.b16 %v129, %v126
    %v148 = vpack.c.b16 %v130, %v127
    %v149 = vpack.c.b16 %v131, %v128
    %v150 = vpack.c.b16 %v135, %v132
    %v151 = vpack.c.b16 %v136, %v133
    %v152 = vpack.c.b16 %v137, %v134
    %v153 = vpack.c.b16 %v141, %v138
    %v154 = vpack.c.b16 %v142, %v139
    %v155 = vpack.c.b16 %v143, %v140
    %vm168 = vcmask 523264
    %v170 = vsel %vm168, %v102, 0
    %v173 = vsel %vm168, %v103, 0
    %175 = vmatprep.subr.bf16.mxu0 %v145
    %176 = vmatpush1.bf16.msra.mxu0 %v144
    %177 = vmatprep.subr.bf16.mxu0 %v148
    %178 = vmatpush1.bf16.msra.mxu0 %v147
    %179 = vmatprep.subr.bf16.mxu0 %v151
    %180 = vmatpush1.bf16.msra.mxu0 %v150
    %181 = vmatprep.subr.bf16.mxu0 %v154
    %182 = vmatpush1.bf16.msra.mxu0 %v153
    %183 = vmatprep.subr.bf16.mxu0 0
    %184 = vmatpush1.bf16.msra.mxu0 0
    %185 = vmatprep.subr.bf16.mxu0 0
    %186 = vmatpush1.bf16.msra.mxu0 0
    %187 = vmatprep.subr.bf16.mxu0 0
    %188 = vmatpush1.bf16.msra.mxu0 0
    %189 = vmatprep.subr.bf16.mxu0 0
    %190 = vmatpush1.bf16.msra.mxu0 0
    %191 = vmatprep.subr.bf16.mxu0 0
    %192 = vmatpush1.bf16.msra.mxu0 0
    %193 = vmatprep.subr.bf16.mxu0 0
    %194 = vmatpush1.bf16.msra.mxu0 0
    %195 = vmatprep.subr.bf16.mxu0 0
    %196 = vmatpush1.bf16.msra.mxu0 0
    %197 = vmatprep.subr.bf16.mxu0 0
    %198 = vmatpush1.bf16.msra.mxu0 0
    %199 = vmatprep.subr.bf16.mxu0 0
    %200 = vmatpush1.bf16.msra.mxu0 0
    %201 = vmatprep.subr.bf16.mxu0 0
    %202 = vmatpush1.bf16.msra.mxu0 0
    %203 = vmatprep.subr.bf16.mxu0 0
    %204 = vmatpush1.bf16.msra.mxu0 0
    %205 = vmatprep.subr.bf16.mxu0 0
    %206 = vmatpush1.bf16.msra.mxu0 0
    %207 = vmatprep.mubr.bf16.mxu0 0
    %208 = vmatmul.mubr.bf16.gmra.mrb[0].mxu0 %v170
    %v209 = vpop.f32.mrb[0].mxu0
    %v210 = vadd.f32 %v84, %v209
    %v211 = vpop.f32.mrb[0].mxu0
    %v212 = vadd.f32 %v88, %v211
    %v213 = vpop.f32.mrb[0].mxu0
    %v214 = vadd.f32 %v84, %v213
    %v215 = vpop.f32.mrb[0].mxu0
    %v216 = vadd.f32 %v88, %v215
    %217 = vmatprep.mubr.bf16.mxu0 0
    %218 = vmatmul.mubr.bf16.gmra.mrb[0].mxu0 %v173
    %v219 = vpop.f32.mrb[0].mxu0
    %v220 = vadd.f32 %v84, %v219
    %v221 = vpop.f32.mrb[0].mxu0
    %v222 = vadd.f32 %v88, %v221
    %v223 = vpop.f32.mrb[0].mxu0
    %v224 = vpop.f32.mrb[0].mxu0
    %225 = vdwg.mxu0
    %226 = vmatprep.subr.bf16.mxu0 0
    %227 = vmatpush1.bf16.msra.mxu0 %v146
    %228 = vmatprep.subr.bf16.mxu0 0
    %229 = vmatpush1.bf16.msra.mxu0 %v149
    %230 = vmatprep.subr.bf16.mxu0 0
    %231 = vmatpush1.bf16.msra.mxu0 %v152
    %232 = vmatprep.subr.bf16.mxu0 0
    %233 = vmatpush1.bf16.msra.mxu0 %v155
    %234 = vmatprep.subr.bf16.mxu0 0
    %235 = vmatpush1.bf16.msra.mxu0 0
    %236 = vmatprep.subr.bf16.mxu0 0
    %237 = vmatpush1.bf16.msra.mxu0 0
    %238 = vmatprep.subr.bf16.mxu0 0
    %239 = vmatpush1.bf16.msra.mxu0 0
    %240 = vmatprep.subr.bf16.mxu0 0
    %241 = vmatpush1.bf16.msra.mxu0 0
    %242 = vmatprep.subr.bf16.mxu0 0
    %243 = vmatpush1.bf16.msra.mxu0 0
    %244 = vmatprep.subr.bf16.mxu0 0
    %245 = vmatpush1.bf16.msra.mxu0 0
    %246 = vmatprep.subr.bf16.mxu0 0
    %247 = vmatpush1.bf16.msra.mxu0 0
    %248 = vmatprep.subr.bf16.mxu0 0
    %249 = vmatpush1.bf16.msra.mxu0 0
    %250 = vmatprep.subr.bf16.mxu0 0
    %251 = vmatpush1.bf16.msra.mxu0 0
    %252 = vmatprep.subr.bf16.mxu0 0
    %253 = vmatpush1.bf16.msra.mxu0 0
    %254 = vmatprep.subr.bf16.mxu0 0
    %255 = vmatpush1.bf16.msra.mxu0 0
    %256 = vmatprep.subr.bf16.mxu0 0
    %257 = vmatpush1.bf16.msra.mxu0 0
    %258 = vmatprep.mubr.bf16.mxu0 0
    %259 = vmatmul.mubr.bf16.gmra.mrb[0].mxu0 %v170
    %v260 = vpop.f32.mrb[0].mxu0
    %v261 = vadd.f32 %v92, %v260
    %v262 = vpop.f32.mrb[0].mxu0
    %v263 = vpop.f32.mrb[0].mxu0
    %v264 = vadd.f32 %v92, %v263
    %v265 = vpop.f32.mrb[0].mxu0
    %266 = vmatprep.mubr.bf16.mxu0 0
    %267 = vmatmul.mubr.bf16.gmra.mrb[0].mxu0 %v173
    %v268 = vpop.f32.mrb[0].mxu0
    %v269 = vadd.f32 %v92, %v268
    %v270 = vpop.f32.mrb[0].mxu0
    %v271 = vpop.f32.mrb[0].mxu0
    %v272 = vpop.f32.mrb[0].mxu0
    %273 = vdwg.mxu0
    %v274 = vpack.c.bf16 %v214, %v210
    %v275 = vpack.c.bf16 %v220, %v220
    %v276 = vpack.c.bf16 %v216, %v212
    %v277 = vpack.c.bf16 %v222, %v222
    %v278 = vpack.c.bf16 %v264, %v261
    %v279 = vpack.c.bf16 %v269, %v269
    %v280 = vld [vmem:[#allocation7] sm:$0xff]
    %v281 = vld [vmem:[#allocation7 + $0x8] sm:$0xff]
    %v282 = vld [vmem:[#allocation7 + $0x10] sm:$0xf]
    %283 = vmatprep.subr.bf16.mxu0 0
    %284 = vmatpush1.bf16.xpose.msra.mxu0 %v276
    %285 = vmatprep.subr.bf16.mxu0 0
    %286 = vmatpush1.bf16.xpose.msra.mxu0 %v277
    %287 = vmatprep.subr.bf16.mxu0 0
    %288 = vmatpush1.bf16.xpose.msra.mxu0 0
    %289 = vmatprep.subr.bf16.mxu0 0
    %290 = vmatpush1.bf16.xpose.msra.mxu0 0
    %291 = vmatprep.subr.bf16.mxu0 0
    %292 = vmatpush1.bf16.xpose.msra.mxu0 0
    %293 = vmatprep.subr.bf16.mxu0 0
    %294 = vmatpush1.bf16.xpose.msra.mxu0 0
    %295 = vmatprep.subr.bf16.mxu0 0
    %296 = vmatpush1.bf16.xpose.msra.mxu0 0
    %297 = vmatprep.subr.bf16.mxu0 0
    %298 = vmatpush1.bf16.xpose.msra.mxu0 0
    %299 = vmatprep.subr.bf16.mxu0 0
    %300 = vmatpush1.bf16.xpose.msra.mxu0 0
    %301 = vmatprep.subr.bf16.mxu0 0
    %302 = vmatpush1.bf16.xpose.msra.mxu0 0
    %303 = vmatprep.subr.bf16.mxu0 0
    %304 = vmatpush1.bf16.xpose.msra.mxu0 0
    %305 = vmatprep.subr.bf16.mxu0 0
    %306 = vmatpush1.bf16.xpose.msra.mxu0 0
    %307 = vmatprep.subr.bf16.mxu0 0
    %308 = vmatpush1.bf16.xpose.msra.mxu0 0
    %309 = vmatprep.subr.bf16.mxu0 0
    %310 = vmatpush1.bf16.xpose.msra.mxu0 0
    %311 = vmatprep.subr.bf16.mxu0 0
    %312 = vmatpush1.bf16.xpose.msra.mxu0 0
    %313 = vmatprep.subr.bf16.mxu0 0
    %314 = vmatpush1.bf16.xpose.msra.mxu0 0
    %315 = vmatprep.mubr.bf16.mxu0 0
    %316 = vmatmul.mubr.bf16.gmra.mrb[0].mxu0 %v274
    %v317 = vpop.f32.mrb[0].mxu0
    %v318 = vadd.f32 %v280, %v317
    %v319 = vpop.f32.mrb[0].mxu0
    %v320 = vpop.f32.mrb[0].mxu0
    %v321 = vadd.f32 %v281, %v320
    %v322 = vpop.f32.mrb[0].mxu0
    %323 = vmatprep.mubr.bf16.mxu0 0
    %324 = vmatmul.mubr.bf16.gmra.mrb[0].mxu0 %v275
    %v325 = vpop.f32.mrb[0].mxu0
    %v326 = vadd.f32 %v282, %v325
    %v327 = vpop.f32.mrb[0].mxu0
    %v328 = vpop.f32.mrb[0].mxu0
    %v329 = vpop.f32.mrb[0].mxu0
    %330 = vdwg.mxu0
    %vm331 = vcmask 162816
    %v332 = vsel %vm331, %v318, -inf
    %333 = vmax.xlane.f32.xlu0 %v332
    %v334 = vpop.xlane.xlu0 %333
    %v335 = vsel %vm331, %v321, -inf
    %336 = vmax.xlane.f32.xlu0 %v335
    %v337 = vpop.xlane.xlu0 %336
    %vm338 = vcmask 158720
    %v339 = vsel %vm338, %v326, -inf
    %340 = vmax.xlane.f32.xlu0 %v339
    %v341 = vpop.xlane.xlu0 %340
    %v342 = vsub.f32 %v318, %v334
    %v343 = vsub.f32 %v321, %v337
    %v344 = vsub.f32 %v326, %v341
    %v345 = vmul.f32 %v342, 1.442695
    %v346 = vpow.pop %v345
    %v347 = vmul.f32 %v343, 1.442695
    %v348 = vpow.pop %v347
    %v349 = vmul.f32 %v344, 1.442695
    %v350 = vpow.pop %v349
    %v351 = vsel %vm331, %v346, 0.0
    %352 = vadd.xlane.f32.xlu0 %v351
    %v353 = vpop.xlane.xlu0 %352
    %v354 = vsel %vm331, %v348, 0.0
    %355 = vadd.xlane.f32.xlu0 %v354
    %v356 = vpop.xlane.xlu0 %355
    %v357 = vsel %vm338, %v350, 0.0
    %358 = vadd.xlane.f32.xlu0 %v357
    %v359 = vpop.xlane.xlu0 %358
    %v360 = vrcp.pop %v353
    %v361 = vrcp.pop %v356
    %v362 = vrcp.pop %v359
    %v363 = vmul.f32 %v346, %v360
    %v364 = vmul.f32 %v348, %v361
    %v365 = vmul.f32 %v350, %v362
    %v366 = vpack.c.bf16 %v364, %v363
    %v367 = vpack.c.bf16 %v365, %v365
    %v369 = vsel %vm331, %v366, 0
    %v372 = vsel %vm331, %v367, 0
    %vm374 = vcmask 1041408
    %v376 = vsel %vm374, %v279, 0
    %378 = vmatprep.subr.bf16.mxu0 0
    %379 = vmatpush1.bf16.msra.mxu0 %v278
    %380 = vmatprep.subr.bf16.mxu0 0
    %381 = vmatpush1.bf16.msra.mxu0 %v376
    %382 = vmatprep.subr.bf16.mxu0 0
    %383 = vmatpush1.bf16.msra.mxu0 0
    %384 = vmatprep.subr.bf16.mxu0 0
    %385 = vmatpush1.bf16.msra.mxu0 0
    %386 = vmatprep.subr.bf16.mxu0 0
    %387 = vmatpush1.bf16.msra.mxu0 0
    %388 = vmatprep.subr.bf16.mxu0 0
    %389 = vmatpush1.bf16.msra.mxu0 0
    %390 = vmatprep.subr.bf16.mxu0 0
    %391 = vmatpush1.bf16.msra.mxu0 0
    %392 = vmatprep.subr.bf16.mxu0 0
    %393 = vmatpush1.bf16.msra.mxu0 0
    %394 = vmatprep.subr.bf16.mxu0 0
    %395 = vmatpush1.bf16.msra.mxu0 0
    %396 = vmatprep.subr.bf16.mxu0 0
    %397 = vmatpush1.bf16.msra.mxu0 0
    %398 = vmatprep.subr.bf16.mxu0 0
    %399 = vmatpush1.bf16.msra.mxu0 0
    %400 = vmatprep.subr.bf16.mxu0 0
    %401 = vmatpush1.bf16.msra.mxu0 0
    %402 = vmatprep.subr.bf16.mxu0 0
    %403 = vmatpush1.bf16.msra.mxu0 0
    %404 = vmatprep.subr.bf16.mxu0 0
    %405 = vmatpush1.bf16.msra.mxu0 0
    %406 = vmatprep.subr.bf16.mxu0 0
    %407 = vmatpush1.bf16.msra.mxu0 0
    %408 = vmatprep.subr.bf16.mxu0 0
    %409 = vmatpush1.bf16.msra.mxu0 0
    %410 = vmatprep.mubr.bf16.mxu0 0
    %411 = vmatmul.mubr.bf16.gmra.mrb[0].mxu0 %v369
    %v412 = vpop.f32.mrb[0].mxu0
    %v413 = vadd.f32 0.0, %v412
    %v414 = vpop.f32.mrb[0].mxu0
    %v415 = vpop.f32.mrb[0].mxu0
    %v416 = vadd.f32 0.0, %v415
    %v417 = vpop.f32.mrb[0].mxu0
    %418 = vmatprep.mubr.bf16.mxu0 0
    %419 = vmatmul.mubr.bf16.gmra.mrb[0].mxu0 %v372
    %v420 = vpop.f32.mrb[0].mxu0
    %v421 = vadd.f32 0.0, %v420
    %v422 = vpop.f32.mrb[0].mxu0
    %v423 = vpop.f32.mrb[0].mxu0
    %v424 = vpop.f32.mrb[0].mxu0
    %425 = vdwg.mxu0
    %426 = vst [vmem:[#allocation8] sm:$0xff] %v413
    %427 = vst [vmem:[#allocation8 + $0x8] sm:$0xff] %v416
    %428 = vst [vmem:[#allocation8 + $0x10] sm:$0xf] %v421
    // Predicated region
    $region30: #{tpu_custom_call.1} parent=1 // pred_check
      _
    $region31: #{tpu_custom_call.1} parent=1 // pred_check_branch
      %430 = sbr.rel (0) target = $region33
    $region32: #{tpu_custom_call.1} parent=1 // pred_region
      %s432 = ssub.s32 384, 384
      %433 = vsyncadd [#allocation4], %s432
      %s434 = sshll.u32 [#allocation8], 4
      %s435 = int_to_ptr.vmem [resolvable:$true] %s434
      %440 = dma.vmem_to_hbm [thread:$0]  %s435, 384, %s4, [#allocation4], 128, 128, 8
    $region33: #{tpu_custom_call.1} parent=1 // pred_fallthru
      _
    // Predicated region
    $region34: #{tpu_custom_call.1} parent=1 // pred_check
      _
    $region35: #{tpu_custom_call.1} parent=1 // pred_check_branch
      %442 = sbr.rel (0) target = $region37
    $region36: #{tpu_custom_call.1} parent=1 // pred_region
      %443 = dma.done [#allocation4], 384
    $region37: #{tpu_custom_call.1} parent=1 // pred_fallthru
      _
    %444 = vsyncpa [#allocation3], 1
    %445 = vsyncpa [#allocation6], 1
    %446 = vsyncpa [#allocation4], 1

</llo_original>
